<compile_context>
chip_gen: v6e
topology: v6e:2x2x1
jax: 0.10.0
libtpu: 0.0.40
codegen_flags: <defaults>
</compile_context>

<pallas_src>
import functools

import jax
import jax.numpy as jnp
from jax.experimental import pallas as pl
from jax.experimental.pallas import tpu as pltpu


# ----------------------------- padded geometry ------------------------------
D_IN = 128     # 81  -> 128   (flattened 1x9x9 input)
D_H1 = 256     # 200 -> 256
D_H2 = 256     # 200 -> 256
D_H3 = 128     # 80  -> 128
D_OUT = 128    # 5   -> 128   (lane-dense output; real logits are cols [0:5])

# slab A (bf16, width 256): rows [0,128)=W1p, [128,384)=W2p
# slab B (bf16, width 128): rows [0,256)=W3p, [256,384)=W4p
SLAB_ROWS = 384
# bias block (f32, 32 x 256): b1 @ row 0, b2 @ row 8, b3 @ row 16, b4 @ row 24
BIAS_ROWS = 32
BIAS_COLS = 256


def _round_up(x, m):
    return ((x + m - 1) // m) * m


def _cdiv(a, b):
    return (a + b - 1) // b


# --------------------------------- kernel -----------------------------------
def siamese_fc_kernel(alpha_ref,     # SMEM (3,) f32 PReLU alphas (scalar prefetch)
                      x_ref,         # VMEM (TB, 128) bf16 batch tile (both branches stacked)
                      wa_ref,        # VMEM (384, 256) bf16  W1p, W2p
                      wb_ref,        # VMEM (384, 128) bf16  W3p, W4p
                      bias_ref,      # VMEM (32, 256)  f32   b1, b2, b3, b4 (8-row-aligned)
                      o_ref):        # VMEM (TB, 128) f32
    x = x_ref[...]                                  # bf16

    # Static, tile-aligned bf16 views of the packed weight slabs (no upcast copies).
    w1 = wa_ref[0:128, :]       # (128, 256) bf16
    w2 = wa_ref[128:384, :]     # (256, 256) bf16
    w3 = wb_ref[0:256, :]       # (256, 128) bf16
    w4 = wb_ref[256:384, :]     # (128, 128) bf16

    # f32 biases, each on its own 8-row-aligned slot (zero-cost sublane-aligned views).
    b1 = bias_ref[0:1, :]       # (1, 256)
    b2 = bias_ref[8:9, :]       # (1, 256)
    b3 = bias_ref[16:17, 0:128]  # (1, 128)
    b4 = bias_ref[24:25, 0:128]  # (1, 128)

    a0 = alpha_ref[0]
    a1 = alpha_ref[1]
    a2 = alpha_ref[2]

    def prelu(h, a):
        # nn.PReLU() with a single shared parameter per layer
        return jnp.where(h >= 0, h, a * h)

    # bf16 x bf16 MXU matmuls with f32 accumulation; activations/bias adds in f32.
    h = jnp.dot(x, w1, preferred_element_type=jnp.float32) + b1
    h = prelu(h, a0)
    h = jnp.dot(h.astype(jnp.bfloat16), w2, preferred_element_type=jnp.float32) + b2
    h = prelu(h, a1)
    h = jnp.dot(h.astype(jnp.bfloat16), w3, preferred_element_type=jnp.float32) + b3
    h = prelu(h, a2)
    h = jnp.dot(h.astype(jnp.bfloat16), w4, preferred_element_type=jnp.float32) + b4
    # TODO(synk): nn.Dropout(0.5) is identity in eval mode; training-mode random
    # masking is not reproduced here.
    o_ref[...] = h.astype(o_ref.dtype)


# ------------------------------ pallas wrapper -------------------------------
@functools.partial(jax.jit, static_argnames=("tb",))
def _fc_pallas(x_pad, alphas, slab_a, slab_b, bias_blk, *, tb):
    rows_p = x_pad.shape[0]
    grid = (rows_p // tb,)

    grid_spec = pltpu.PrefetchScalarGridSpec(
        num_scalar_prefetch=1,                                       # alphas -> SMEM
        grid=grid,
        in_specs=[
            pl.BlockSpec((tb, D_IN), lambda i, a: (i, 0)),           # batch tile
            pl.BlockSpec((SLAB_ROWS, D_H1), lambda i, a: (0, 0)),    # VMEM-resident
            pl.BlockSpec((SLAB_ROWS, D_H3), lambda i, a: (0, 0)),    # VMEM-resident
            pl.BlockSpec((BIAS_ROWS, BIAS_COLS), lambda i, a: (0, 0)),
        ],
        out_specs=pl.BlockSpec((tb, D_OUT), lambda i, a: (i, 0)),
    )

    # Advisory cost hint for the surrounding XLA schedule.
    flops = 2 * rows_p * (D_IN * D_H1 + D_H1 * D_H2 + D_H2 * D_H3 + D_H3 * D_OUT)
    bytes_accessed = (rows_p * (D_IN * 2 + D_OUT * 4)
                      + SLAB_ROWS * (D_H1 + D_H3) * 2
                      + BIAS_ROWS * BIAS_COLS * 4)

    return pl.pallas_call(
        siamese_fc_kernel,
        out_shape=jax.ShapeDtypeStruct((rows_p, D_OUT), jnp.float32),
        grid_spec=grid_spec,
        compiler_params=pltpu.CompilerParams(
            dimension_semantics=("parallel",)),   # batch tiles shard over v7x's 2 TCs
        cost_estimate=pl.CostEstimate(flops=int(flops), transcendentals=0,
                                      bytes_accessed=int(bytes_accessed)),
    )(alphas, x_pad, slab_a, slab_b, bias_blk)


def _choose_tile(rows, max_tb=1024):
    """Pick (tile_rows, padded_rows): >=2 tiles whenever rows > 8 (v7x megacore),
    tiles sized ~cdiv(rows, n_tiles) (capped at max_tb) to minimize dead padding."""
    rows8 = _round_up(max(rows, 1), 8)
    if rows8 <= 8:
        return 8, 8
    n_tiles = max(2, _cdiv(rows8, max_tb))
    tb = _round_up(_cdiv(rows8, n_tiles), 8)
    rows_p = n_tiles * tb
    return tb, rows_p


def siamese_forward(input1, input2, params, *, max_tb=1024):
    """SiameseNetFlatten.forward: flatten NCHW inputs, run the fused fc stack once
    on the stacked (2B, 81) batch, split back into the two branch outputs."""
    slab_a, slab_b, bias_blk, alphas = params
    B = input1.shape[0]
    x = jnp.concatenate(
        [input1.reshape(B, -1), input2.reshape(B, -1)], axis=0)      # (2B, 81)
    rows = 2 * B
    tb, rows_p = _choose_tile(rows, max_tb)
    # Stage the batch in bf16 (first matmul consumes bf16 anyway) -> half the
    # input-side HBM bytes; zero-pad 81 -> 128 lanes and rows -> rows_p.
    x_pad = jnp.zeros((rows_p, D_IN), jnp.bfloat16).at[:rows, :81].set(
        x.astype(jnp.bfloat16))
    out = _fc_pallas(x_pad, alphas, slab_a, slab_b, bias_blk, tb=tb)
    out = out[:rows, :5]                      # drop batch / lane padding
    return out[:B], out[B:]


# ------------------------------- parameters ---------------------------------
def pack_params(w1, b1, w2, b2, w3, b3, w4, b4, dtype=jnp.bfloat16):
    """Pack (in, out)-layout weights into two zero-padded bf16 slabs and the
    biases into a small f32 block with 8-row-aligned slots."""
    slab_a = jnp.zeros((SLAB_ROWS, D_H1), dtype)
    slab_a = slab_a.at[0:81, 0:200].set(w1.astype(dtype))
    slab_a = slab_a.at[128:328, 0:200].set(w2.astype(dtype))

    slab_b = jnp.zeros((SLAB_ROWS, D_H3), dtype)
    slab_b = slab_b.at[0:200, 0:80].set(w3.astype(dtype))
    slab_b = slab_b.at[256:336, 0:5].set(w4.astype(dtype))

    bias_blk = jnp.zeros((BIAS_ROWS, BIAS_COLS), jnp.float32)
    bias_blk = bias_blk.at[0, 0:200].set(b1.astype(jnp.float32))
    bias_blk = bias_blk.at[8, 0:200].set(b2.astype(jnp.float32))
    bias_blk = bias_blk.at[16, 0:80].set(b3.astype(jnp.float32))
    bias_blk = bias_blk.at[24, 0:5].set(b4.astype(jnp.float32))
    return slab_a, slab_b, bias_blk


def init_params(key, weights_dtype=jnp.bfloat16):
    """nn.Linear-style init (weights stored (in, out) so kernel does x @ W + b)."""
    def linear(k, fan_in, fan_out):
        kw, kb = jax.random.split(k)
        bound = 1.0 / jnp.sqrt(fan_in)
        w = jax.random.uniform(kw, (fan_in, fan_out), jnp.float32, -bound, bound)
        b = jax.random.uniform(kb, (fan_out,), jnp.float32, -bound, bound)
        return w, b

    k1, k2, k3, k4 = jax.random.split(key, 4)
    w1, b1 = linear(k1, 81, 200)
    w2, b2 = linear(k2, 200, 200)
    w3, b3 = linear(k3, 200, 80)
    w4, b4 = linear(k4, 80, 5)
    alphas = jnp.full((3,), 0.25, jnp.float32)          # nn.PReLU() default init
    slab_a, slab_b, bias_blk = pack_params(w1, b1, w2, b2, w3, b3, w4, b4,
                                           dtype=weights_dtype)
    packed = (slab_a, slab_b, bias_blk, alphas)
    raw = (w1, b1, w2, b2, w3, b3, w4, b4, alphas)
    return packed, raw


# -------------------------- pure-JAX reference check -------------------------
def _reference(input1, input2, raw_params):
    """Same math in plain JAX: bf16 weights/activations into the matmuls, f32
    accumulation, f32 biases and PReLU — mirroring the kernel's numerics."""
    w1, b1, w2, b2, w3, b3, w4, b4, alphas = raw_params
    bf = lambda t: t.astype(jnp.bfloat16)

    def fc(x):
        h = jnp.dot(bf(x), bf(w1), preferred_element_type=jnp.float32) + b1
        h = jnp.where(h >= 0, h, alphas[0] * h)
        h = jnp.dot(bf(h), bf(w2), preferred_element_type=jnp.float32) + b2
        h = jnp.where(h >= 0, h, alphas[1] * h)
        h = jnp.dot(bf(h), bf(w3), preferred_element_type=jnp.float32) + b3
        h = jnp.where(h >= 0, h, alphas[2] * h)
        return jnp.dot(bf(h), bf(w4), preferred_element_type=jnp.float32) + b4

    B = input1.shape[0]
    return fc(input1.reshape(B, -1)), fc(input2.reshape(B, -1))


if __name__ == "__main__":
    key = jax.random.PRNGKey(0)
    kp, ka, kb = jax.random.split(key, 3)

    params, raw = init_params(kp)

    B = 2
    input1 = jax.random.normal(ka, (B, 1, 9, 9), jnp.float32)   # NCHW -> flattens to 81
    input2 = jax.random.normal(kb, (B, 1, 9, 9), jnp.float32)

    o1, o2 = siamese_forward(input1, input2, params)
    jax.block_until_ready((o1, o2))

    assert o1.shape == (B, 5) and o2.shape == (B, 5)

    r1, r2 = _reference(input1, input2, raw)
    assert jnp.allclose(o1, r1, atol=2e-3, rtol=2e-3)
    assert jnp.allclose(o2, r2, atol=2e-3, rtol=2e-3)

    print("KERNEL_OK")
</pallas_src>

<mosaic_0001>
module attributes {stable_mosaic.version = 11 : i64} {
  func.func @siamese_fc_kernel(%arg0: i32, %arg1: memref<3xf32, #tpu.memory_space<smem>>, %arg2: memref<8x128xbf16, #tpu.memory_space<vmem>>, %arg3: memref<384x256xbf16, #tpu.memory_space<vmem>>, %arg4: memref<384x128xbf16, #tpu.memory_space<vmem>>, %arg5: memref<32x256xf32, #tpu.memory_space<vmem>>, %arg6: memref<8x128xf32, #tpu.memory_space<vmem>>) attributes {dimension_semantics = [#tpu.dimension_semantics<parallel>], iteration_bounds = array<i64: 1>, scalar_prefetch = 1 : i64, scratch_operands = 0 : i64, tpu.core_type = #tpu.core_type<tc>, window_params = [{transform_indices = @transform_0, window_bounds = array<i64: 8, 128>}, {pipeline_mode = #tpu.pipeline_mode<synchronous>, transform_indices = @transform_1, window_bounds = array<i64: 384, 256>}, {pipeline_mode = #tpu.pipeline_mode<synchronous>, transform_indices = @transform_2, window_bounds = array<i64: 384, 128>}, {pipeline_mode = #tpu.pipeline_mode<synchronous>, transform_indices = @transform_3, window_bounds = array<i64: 32, 256>}, {transform_indices = @transform_4, window_bounds = array<i64: 8, 128>}]} {
    %c0 = arith.constant 0 : index
    %c0_0 = arith.constant 0 : index
    %0 = vector.load %arg2[%c0, %c0_0] : memref<8x128xbf16, #tpu.memory_space<vmem>>, vector<8x128xbf16>
    %c0_1 = arith.constant 0 : index
    %c0_2 = arith.constant 0 : index
    %1 = vector.load %arg3[%c0_1, %c0_2] : memref<384x256xbf16, #tpu.memory_space<vmem>>, vector<128x256xbf16>
    %c128 = arith.constant 128 : index
    %c0_3 = arith.constant 0 : index
    %2 = vector.load %arg3[%c128, %c0_3] : memref<384x256xbf16, #tpu.memory_space<vmem>>, vector<256x256xbf16>
    %c0_4 = arith.constant 0 : index
    %c0_5 = arith.constant 0 : index
    %3 = vector.load %arg4[%c0_4, %c0_5] : memref<384x128xbf16, #tpu.memory_space<vmem>>, vector<256x128xbf16>
    %c256 = arith.constant 256 : index
    %c0_6 = arith.constant 0 : index
    %4 = vector.load %arg4[%c256, %c0_6] : memref<384x128xbf16, #tpu.memory_space<vmem>>, vector<128x128xbf16>
    %c0_7 = arith.constant 0 : index
    %c0_8 = arith.constant 0 : index
    %5 = vector.load %arg5[%c0_7, %c0_8] : memref<32x256xf32, #tpu.memory_space<vmem>>, vector<1x256xf32>
    %c8 = arith.constant 8 : index
    %c0_9 = arith.constant 0 : index
    %6 = vector.load %arg5[%c8, %c0_9] : memref<32x256xf32, #tpu.memory_space<vmem>>, vector<1x256xf32>
    %c16 = arith.constant 16 : index
    %c0_10 = arith.constant 0 : index
    %7 = vector.load %arg5[%c16, %c0_10] : memref<32x256xf32, #tpu.memory_space<vmem>>, vector<1x128xf32>
    %c24 = arith.constant 24 : index
    %c0_11 = arith.constant 0 : index
    %8 = vector.load %arg5[%c24, %c0_11] : memref<32x256xf32, #tpu.memory_space<vmem>>, vector<1x128xf32>
    %c0_12 = arith.constant 0 : index
    %9 = memref.load %arg1[%c0_12] : memref<3xf32, #tpu.memory_space<smem>>
    %c1 = arith.constant 1 : index
    %10 = memref.load %arg1[%c1] : memref<3xf32, #tpu.memory_space<smem>>
    %c2 = arith.constant 2 : index
    %11 = memref.load %arg1[%c2] : memref<3xf32, #tpu.memory_space<smem>>
    %cst = arith.constant dense<0.000000e+00> : vector<8x256xf32>
    %12 = tpu.matmul %0, %1, %cst {dimension_numbers = #tpu.dot_dimension_numbers<[1], [0], [0], [1], [0, 0, 1, 1], [], []>} : vector<8x128xbf16>, vector<128x256xbf16>, vector<8x256xf32> -> vector<8x256xf32>
    %13 = vector.broadcast %5 : vector<1x256xf32> to vector<8x256xf32>
    %14 = arith.addf %12, %13 : vector<8x256xf32>
    %cst_13 = arith.constant 0.000000e+00 : f32
    %15 = vector.broadcast %cst_13 : f32 to vector<8x256xf32>
    %16 = arith.cmpf oge, %14, %15 : vector<8x256xf32>
    %17 = vector.broadcast %9 : f32 to vector<8x256xf32>
    %18 = arith.mulf %17, %14 : vector<8x256xf32>
    %19 = arith.select %16, %14, %18 : vector<8x256xi1>, vector<8x256xf32>
    %20 = arith.truncf %19 : vector<8x256xf32> to vector<8x256xbf16>
    %cst_14 = arith.constant dense<0.000000e+00> : vector<8x256xf32>
    %21 = tpu.matmul %20, %2, %cst_14 {dimension_numbers = #tpu.dot_dimension_numbers<[1], [0], [0], [1], [0, 0, 1, 1], [], []>} : vector<8x256xbf16>, vector<256x256xbf16>, vector<8x256xf32> -> vector<8x256xf32>
    %22 = vector.broadcast %6 : vector<1x256xf32> to vector<8x256xf32>
    %23 = arith.addf %21, %22 : vector<8x256xf32>
    %cst_15 = arith.constant 0.000000e+00 : f32
    %24 = vector.broadcast %cst_15 : f32 to vector<8x256xf32>
    %25 = arith.cmpf oge, %23, %24 : vector<8x256xf32>
    %26 = vector.broadcast %10 : f32 to vector<8x256xf32>
    %27 = arith.mulf %26, %23 : vector<8x256xf32>
    %28 = arith.select %25, %23, %27 : vector<8x256xi1>, vector<8x256xf32>
    %29 = arith.truncf %28 : vector<8x256xf32> to vector<8x256xbf16>
    %cst_16 = arith.constant dense<0.000000e+00> : vector<8x128xf32>
    %30 = tpu.matmul %29, %3, %cst_16 {dimension_numbers = #tpu.dot_dimension_numbers<[1], [0], [0], [1], [0, 0, 1, 1], [], []>} : vector<8x256xbf16>, vector<256x128xbf16>, vector<8x128xf32> -> vector<8x128xf32>
    %31 = vector.broadcast %7 : vector<1x128xf32> to vector<8x128xf32>
    %32 = arith.addf %30, %31 : vector<8x128xf32>
    %cst_17 = arith.constant 0.000000e+00 : f32
    %33 = vector.broadcast %cst_17 : f32 to vector<8x128xf32>
    %34 = arith.cmpf oge, %32, %33 : vector<8x128xf32>
    %35 = vector.broadcast %11 : f32 to vector<8x128xf32>
    %36 = arith.mulf %35, %32 : vector<8x128xf32>
    %37 = arith.select %34, %32, %36 : vector<8x128xi1>, vector<8x128xf32>
    %38 = arith.truncf %37 : vector<8x128xf32> to vector<8x128xbf16>
    %cst_18 = arith.constant dense<0.000000e+00> : vector<8x128xf32>
    %39 = tpu.matmul %38, %4, %cst_18 {dimension_numbers = #tpu.dot_dimension_numbers<[1], [0], [0], [1], [0, 0, 1, 1], [], []>} : vector<8x128xbf16>, vector<128x128xbf16>, vector<8x128xf32> -> vector<8x128xf32>
    %40 = vector.broadcast %8 : vector<1x128xf32> to vector<8x128xf32>
    %41 = arith.addf %39, %40 : vector<8x128xf32>
    %c0_19 = arith.constant 0 : index
    %c0_20 = arith.constant 0 : index
    %42 = vector.load %arg6[%c0_19, %c0_20] : memref<8x128xf32, #tpu.memory_space<vmem>>, vector<8x128xf32>
    tpu.vector_store %arg6[%c0_19, %c0_20], %41 {strides = array<i32>} : memref<8x128xf32, #tpu.memory_space<vmem>>, vector<8x128xf32>,
    return
  }
  func.func @transform_0(%arg0: i32, %arg1: memref<3xf32, #tpu.memory_space<smem>>) -> (i32, i32) {
    %c0_i32 = arith.constant 0 : i32
    %c0_i32_0 = arith.constant 0 : i32
    return %arg0, %c0_i32 : i32, i32
  }
  func.func @transform_1(%arg0: i32, %arg1: memref<3xf32, #tpu.memory_space<smem>>) -> (i32, i32) {
    %c0_i32 = arith.constant 0 : i32
    %c0_i32_0 = arith.constant 0 : i32
    %c0_i32_1 = arith.constant 0 : i32
    return %c0_i32, %c0_i32_0 : i32, i32
  }
  func.func @transform_2(%arg0: i32, %arg1: memref<3xf32, #tpu.memory_space<smem>>) -> (i32, i32) {
    %c0_i32 = arith.constant 0 : i32
    %c0_i32_0 = arith.constant 0 : i32
    %c0_i32_1 = arith.constant 0 : i32
    return %c0_i32, %c0_i32_0 : i32, i32
  }
  func.func @transform_3(%arg0: i32, %arg1: memref<3xf32, #tpu.memory_space<smem>>) -> (i32, i32) {
    %c0_i32 = arith.constant 0 : i32
    %c0_i32_0 = arith.constant 0 : i32
    %c0_i32_1 = arith.constant 0 : i32
    return %c0_i32, %c0_i32_0 : i32, i32
  }
  func.func @transform_4(%arg0: i32, %arg1: memref<3xf32, #tpu.memory_space<smem>>) -> (i32, i32) {
    %c0_i32 = arith.constant 0 : i32
    %c0_i32_0 = arith.constant 0 : i32
    return %arg0, %c0_i32 : i32, i32
  }
}

</mosaic_0001>

<llo_original>
// kernel: _fc_pallas.1
$region0: #{_fc_pallas.1}
  #allocation0 [shape = 'u32[]', space=smem, size = 0x4, offset = 0x4, fixed_abs, tag = 'smem constant byte address 0x4 - core index']
  #allocation1 [shape = 'u32[144,128]{1,0:T(1,128)}', space=vmem, size = 0x12000, scoped, tag = 'internal scratch']
  #allocation2 [shape = 's32[1]{0}', space=sflag, size = 0x4, scoped, tag = 'scoped memory for _fc_pallas.1']
  #allocation3 [shape = 'u8[512]{0}', space=smem, size = 0x200, scoped, tag = 'prefetched SMEM operand 0']
  %s0 = inlined_call_operand.vmem [shape: f32[3], index: 0, kind: input, shape index: {}]
  %s1 = inlined_call_operand.hbm [shape: bf16[8,128], index: 1, kind: input, shape index: {}]
  %s2 = inlined_call_operand.hbm [shape: bf16[384,256], index: 2, kind: input, shape index: {}]
  %s3 = inlined_call_operand.hbm [shape: bf16[384,128], index: 3, kind: input, shape index: {}]
  %s4 = inlined_call_operand.hbm [shape: f32[32,256], index: 4, kind: input, shape index: {}]
  %s5 = inlined_call_operand.hbm [shape: f32[8,128], index: 5, kind: output, shape index: {}]
  %s6 = sld [smem:[#allocation0]]
  $region42: #{_fc_pallas.1} parent=0
    _
  %s8 = ssub.s32 1, %s6
  %s9 = scalar_select 0, %s8, %s6
  %s10 = sshll.u32 %s0, 4
  %s11 = int_to_ptr.vmem [resolvable:$true] %s10
  %13 = dma.vmem_to_smem %s11, 16, [#allocation3], [#allocation2]
  %14 = dma.done [#allocation2], 16
  %15 = sfence
  $region1: #{_fc_pallas.1} parent=0
    #allocation4 [shape = 'u8[2048]{0}', space=vmem, size = 0x800, scoped, tag = 'input window, operand 1, single buffered']
    #allocation5 [shape = 's32[1]{0}', space=sflag, size = 0x4, scoped, tag = 'scoped memory for _fc_pallas.1']
    #allocation6 [shape = 's32[1]{0}', space=sflag, size = 0x4, scoped, tag = 'scoped memory for _fc_pallas.1']
    #allocation7 [shape = 'u8[196608]{0}', space=vmem, size = 0x30000, scoped, tag = 'input window, operand 2, single buffered']
    #allocation8 [shape = 's32[1]{0}', space=sflag, size = 0x4, scoped, tag = 'scoped memory for _fc_pallas.1']
    #allocation9 [shape = 'u8[98304]{0}', space=vmem, size = 0x18000, scoped, tag = 'input window, operand 3, single buffered']
    #allocation10 [shape = 'u8[32768]{0}', space=vmem, size = 0x8000, scoped, tag = 'input window, operand 4, single buffered']
    #allocation11 [shape = 's32[1]{0}', space=sflag, size = 0x4, scoped, tag = 'scoped memory for _fc_pallas.1']
    #allocation12 [shape = 'u8[4096]{0}', space=vmem, size = 0x1000, scoped, tag = 'output window, operand 0, single buffered']
    %16 = vsyncpa [#allocation5], 0
    %17 = vsyncpa [#allocation8], 0
    %18 = vsyncpa [#allocation11], 0
    %19 = vsyncpa [#allocation6], 0
    // Predicated region
    $region2: #{_fc_pallas.1} parent=1 // pred_check
      _
    $region3: #{_fc_pallas.1} parent=1 // pred_check_branch
      %21 = sbr.rel (0) target = $region5
    $region4: #{_fc_pallas.1} parent=1 // pred_region
      %s23 = ssub.s32 64, 64
      %24 = vsyncadd [#allocation5], %s23
      %s26 = sshll.u32 [#allocation4], 4
      %s27 = int_to_ptr.vmem [resolvable:$true] %s26
      %29 = dma.hbm_to_vmem [thread:$0]  %s1, 64, %s27, [#allocation5]
    $region5: #{_fc_pallas.1} parent=1 // pred_fallthru
      _
    // Predicated region
    $region6: #{_fc_pallas.1} parent=1 // pred_check
      _
    $region7: #{_fc_pallas.1} parent=1 // pred_check_branch
      %31 = sbr.rel (0) target = $region9
    $region8: #{_fc_pallas.1} parent=1 // pred_region
      %s33 = ssub.s32 6144, 6144
      %34 = vsyncadd [#allocation8], %s33
      %s35 = sshll.u32 [#allocation7], 4
      %s36 = int_to_ptr.vmem [resolvable:$true] %s35
      %41 = dma.hbm_to_vmem [thread:$0]  %s2, 6144, %s36, [#allocation8], 128, 128, 8
    $region9: #{_fc_pallas.1} parent=1 // pred_fallthru
      _
    // Predicated region
    $region10: #{_fc_pallas.1} parent=1 // pred_check
      _
    $region11: #{_fc_pallas.1} parent=1 // pred_check_branch
      %43 = sbr.rel (0) target = $region13
    $region12: #{_fc_pallas.1} parent=1 // pred_region
      %s45 = ssub.s32 3072, 3072
      %46 = vsyncadd [#allocation8], %s45
      %s47 = sshll.u32 [#allocation9], 4
      %s48 = int_to_ptr.vmem [resolvable:$true] %s47
      %53 = dma.hbm_to_vmem [thread:$0]  %s3, 3072, %s48, [#allocation8], 64, 64, 4
    $region13: #{_fc_pallas.1} parent=1 // pred_fallthru
      _
    // Predicated region
    $region14: #{_fc_pallas.1} parent=1 // pred_check
      _
    $region15: #{_fc_pallas.1} parent=1 // pred_check_branch
      %55 = sbr.rel (0) target = $region17
    $region16: #{_fc_pallas.1} parent=1 // pred_region
      %s57 = ssub.s32 1024, 1024
      %58 = vsyncadd [#allocation11], %s57
      %s59 = sshll.u32 [#allocation10], 4
      %s60 = int_to_ptr.vmem [resolvable:$true] %s59
      %65 = dma.hbm_to_vmem [thread:$0]  %s4, 1024, %s60, [#allocation11], 256, 256, 16
    $region17: #{_fc_pallas.1} parent=1 // pred_fallthru
      _
    // Predicated region
    $region18: #{_fc_pallas.1} parent=1 // pred_check
      _
    $region19: #{_fc_pallas.1} parent=1 // pred_check_branch
      %67 = sbr.rel (0) target = $region21
    $region20: #{_fc_pallas.1} parent=1 // pred_region
      %68 = dma.done [#allocation5], 64
    $region21: #{_fc_pallas.1} parent=1 // pred_fallthru
      _
    // Predicated region
    $region22: #{_fc_pallas.1} parent=1 // pred_check
      _
    $region23: #{_fc_pallas.1} parent=1 // pred_check_branch
      %70 = sbr.rel (0) target = $region25
    $region24: #{_fc_pallas.1} parent=1 // pred_region
      %71 = dma.done [#allocation8], 6144
    $region25: #{_fc_pallas.1} parent=1 // pred_fallthru
      _
    // Predicated region
    $region26: #{_fc_pallas.1} parent=1 // pred_check
      _
    $region27: #{_fc_pallas.1} parent=1 // pred_check_branch
      %73 = sbr.rel (0) target = $region29
    $region28: #{_fc_pallas.1} parent=1 // pred_region
      %74 = dma.done [#allocation8], 3072
    $region29: #{_fc_pallas.1} parent=1 // pred_fallthru
      _
    // Predicated region
    $region30: #{_fc_pallas.1} parent=1 // pred_check
      _
    $region31: #{_fc_pallas.1} parent=1 // pred_check_branch
      %76 = sbr.rel (0) target = $region33
    $region32: #{_fc_pallas.1} parent=1 // pred_region
      %77 = dma.done [#allocation11], 1024
    $region33: #{_fc_pallas.1} parent=1 // pred_fallthru
      _
    %v79 = vld [vmem:[#allocation4] sm:$0xf]
    %v80 = vld [vmem:[#allocation7] sm:$0xff]
    %v81 = vld [vmem:[#allocation7 + $0x8] sm:$0xff]
    %v82 = vld [vmem:[#allocation7 + $0x10] sm:$0xff]
    %v83 = vld [vmem:[#allocation7 + $0x18] sm:$0xff]
    %v84 = vld [vmem:[#allocation7 + $0x20] sm:$0xff]
    %v85 = vld [vmem:[#allocation7 + $0x28] sm:$0xff]
    %v86 = vld [vmem:[#allocation7 + $0x30] sm:$0xff]
    %v87 = vld [vmem:[#allocation7 + $0x38] sm:$0xff]
    %v88 = vld [vmem:[#allocation7 + $0x40] sm:$0xff]
    %v89 = vld [vmem:[#allocation7 + $0x48] sm:$0xff]
    %v90 = vld [vmem:[#allocation7 + $0x50] sm:$0xff]
    %v91 = vld [vmem:[#allocation7 + $0x58] sm:$0xff]
    %v92 = vld [vmem:[#allocation7 + $0x60] sm:$0xff]
    %v93 = vld [vmem:[#allocation7 + $0x68] sm:$0xff]
    %v94 = vld [vmem:[#allocation7 + $0x70] sm:$0xff]
    %v95 = vld [vmem:[#allocation7 + $0x78] sm:$0xff]
    %v96 = vld [vmem:[#allocation7 + $0x80] sm:$0xff]
    %v97 = vld [vmem:[#allocation7 + $0x88] sm:$0xff]
    %v98 = vld [vmem:[#allocation7 + $0x90] sm:$0xff]
    %v99 = vld [vmem:[#allocation7 + $0x98] sm:$0xff]
    %v100 = vld [vmem:[#allocation7 + $0xa0] sm:$0xff]
    %v101 = vld [vmem:[#allocation7 + $0xa8] sm:$0xff]
    %v102 = vld [vmem:[#allocation7 + $0xb0] sm:$0xff]
    %v103 = vld [vmem:[#allocation7 + $0xb8] sm:$0xff]
    %v104 = vld [vmem:[#allocation7 + $0xc0] sm:$0xff]
    %v105 = vld [vmem:[#allocation7 + $0xc8] sm:$0xff]
    %v106 = vld [vmem:[#allocation7 + $0xd0] sm:$0xff]
    %v107 = vld [vmem:[#allocation7 + $0xd8] sm:$0xff]
    %v108 = vld [vmem:[#allocation7 + $0xe0] sm:$0xff]
    %v109 = vld [vmem:[#allocation7 + $0xe8] sm:$0xff]
    %v110 = vld [vmem:[#allocation7 + $0xf0] sm:$0xff]
    %v111 = vld [vmem:[#allocation7 + $0xf8] sm:$0xff]
    %v112 = vld [vmem:[#allocation7 + $0x100] sm:$0xff]
    %v113 = vld [vmem:[#allocation7 + $0x108] sm:$0xff]
    %v114 = vld [vmem:[#allocation7 + $0x110] sm:$0xff]
    %v115 = vld [vmem:[#allocation7 + $0x118] sm:$0xff]
    %v116 = vld [vmem:[#allocation7 + $0x120] sm:$0xff]
    %v117 = vld [vmem:[#allocation7 + $0x128] sm:$0xff]
    %v118 = vld [vmem:[#allocation7 + $0x130] sm:$0xff]
    %v119 = vld [vmem:[#allocation7 + $0x138] sm:$0xff]
    %v120 = vld [vmem:[#allocation7 + $0x140] sm:$0xff]
    %v121 = vld [vmem:[#allocation7 + $0x148] sm:$0xff]
    %v122 = vld [vmem:[#allocation7 + $0x150] sm:$0xff]
    %v123 = vld [vmem:[#allocation7 + $0x158] sm:$0xff]
    %v124 = vld [vmem:[#allocation7 + $0x160] sm:$0xff]
    %v125 = vld [vmem:[#allocation7 + $0x168] sm:$0xff]
    %v126 = vld [vmem:[#allocation7 + $0x170] sm:$0xff]
    %v127 = vld [vmem:[#allocation7 + $0x178] sm:$0xff]
    %v128 = vld [vmem:[#allocation9] sm:$0xf]
    %v129 = vld [vmem:[#allocation9 + $0x4] sm:$0xf]
    %v130 = vld [vmem:[#allocation9 + $0x8] sm:$0xf]
    %v131 = vld [vmem:[#allocation9 + $0xc] sm:$0xf]
    %v132 = vld [vmem:[#allocation9 + $0x10] sm:$0xf]
    %v133 = vld [vmem:[#allocation9 + $0x14] sm:$0xf]
    %v134 = vld [vmem:[#allocation9 + $0x18] sm:$0xf]
    %v135 = vld [vmem:[#allocation9 + $0x1c] sm:$0xf]
    %v136 = vld [vmem:[#allocation9 + $0x20] sm:$0xf]
    %v137 = vld [vmem:[#allocation9 + $0x24] sm:$0xf]
    %v138 = vld [vmem:[#allocation9 + $0x28] sm:$0xf]
    %v139 = vld [vmem:[#allocation9 + $0x2c] sm:$0xf]
    %v140 = vld [vmem:[#allocation9 + $0x30] sm:$0xf]
    %v141 = vld [vmem:[#allocation9 + $0x34] sm:$0xf]
    %v142 = vld [vmem:[#allocation9 + $0x38] sm:$0xf]
    %v143 = vld [vmem:[#allocation9 + $0x3c] sm:$0xf]
    %v144 = vld [vmem:[#allocation9 + $0x40] sm:$0xf]
    %v145 = vld [vmem:[#allocation9 + $0x44] sm:$0xf]
    %v146 = vld [vmem:[#allocation9 + $0x48] sm:$0xf]
    %v147 = vld [vmem:[#allocation9 + $0x4c] sm:$0xf]
    %v148 = vld [vmem:[#allocation9 + $0x50] sm:$0xf]
    %v149 = vld [vmem:[#allocation9 + $0x54] sm:$0xf]
    %v150 = vld [vmem:[#allocation9 + $0x58] sm:$0xf]
    %v151 = vld [vmem:[#allocation9 + $0x5c] sm:$0xf]
    %v152 = vld [vmem:[#allocation9 + $0x60] sm:$0xf]
    %v153 = vld [vmem:[#allocation9 + $0x64] sm:$0xf]
    %v154 = vld [vmem:[#allocation9 + $0x68] sm:$0xf]
    %v155 = vld [vmem:[#allocation9 + $0x6c] sm:$0xf]
    %v156 = vld [vmem:[#allocation9 + $0x70] sm:$0xf]
    %v157 = vld [vmem:[#allocation9 + $0x74] sm:$0xf]
    %v158 = vld [vmem:[#allocation9 + $0x78] sm:$0xf]
    %v159 = vld [vmem:[#allocation9 + $0x7c] sm:$0xf]
    %v160 = vld [vmem:[#allocation9 + $0x80] sm:$0xf]
    %v161 = vld [vmem:[#allocation9 + $0x84] sm:$0xf]
    %v162 = vld [vmem:[#allocation9 + $0x88] sm:$0xf]
    %v163 = vld [vmem:[#allocation9 + $0x8c] sm:$0xf]
    %v164 = vld [vmem:[#allocation9 + $0x90] sm:$0xf]
    %v165 = vld [vmem:[#allocation9 + $0x94] sm:$0xf]
    %v166 = vld [vmem:[#allocation9 + $0x98] sm:$0xf]
    %v167 = vld [vmem:[#allocation9 + $0x9c] sm:$0xf]
    %v168 = vld [vmem:[#allocation9 + $0xa0] sm:$0xf]
    %v169 = vld [vmem:[#allocation9 + $0xa4] sm:$0xf]
    %v170 = vld [vmem:[#allocation9 + $0xa8] sm:$0xf]
    %v171 = vld [vmem:[#allocation9 + $0xac] sm:$0xf]
    %v172 = vld [vmem:[#allocation9 + $0xb0] sm:$0xf]
    %v173 = vld [vmem:[#allocation9 + $0xb4] sm:$0xf]
    %v174 = vld [vmem:[#allocation9 + $0xb8] sm:$0xf]
    %v175 = vld [vmem:[#allocation9 + $0xbc] sm:$0xf]
    %v176 = vld [vmem:[#allocation10] ss:$8 sm:$0x3]
    %s177 = scalar_lea.vmem [#allocation10], 16
    %v178 = vld [vmem:[%s177] ss:$8 sm:$0x3]
    %v179 = vld [vmem:[#allocation10 + $0x20] ss:$0 sm:$0xff]
    %v180 = vld [vmem:[#allocation10 + $0x30] ss:$0 sm:$0xff]
    %s181 = sld [smem:[#allocation3]]
    %s182 = sld [smem:[#allocation3 + $0x1]]
    %s183 = sld [smem:[#allocation3 + $0x2]]
    %v185 = vlaneseq
    %v186 = vshrl.u32 %v185, 7
    %v187 = vsub.s32 0, %v186
    %v188 = vrot.slane %v176, %v187
    %v189 = vlaneseq
    %v190 = vshrl.u32 %v189, 7
    %v191 = vsub.s32 1, %v190
    %v192 = vrot.slane %v176, %v191
    %v211 = vunpack.c.l.b16 %v80
    %v212 = vunpack.c.h.b16 %v80
    %v213 = vunpack.c.l.b16 %v81
    %v214 = vunpack.c.h.b16 %v81
    %v215 = vunpack.c.l.b16 %v82
    %v216 = vunpack.c.h.b16 %v82
    %v217 = vunpack.c.l.b16 %v83
    %v218 = vunpack.c.h.b16 %v83
    %v219 = vunpack.c.l.b16 %v84
    %v220 = vunpack.c.h.b16 %v84
    %v221 = vunpack.c.l.b16 %v85
    %v222 = vunpack.c.h.b16 %v85
    %v223 = vunpack.c.l.b16 %v86
    %v224 = vunpack.c.h.b16 %v86
    %v225 = vunpack.c.l.b16 %v87
    %v226 = vunpack.c.h.b16 %v87
    %v227 = vunpack.c.l.b16 %v88
    %v228 = vunpack.c.h.b16 %v88
    %v229 = vunpack.c.l.b16 %v89
    %v230 = vunpack.c.h.b16 %v89
    %v231 = vunpack.c.l.b16 %v90
    %v232 = vunpack.c.h.b16 %v90
    %v233 = vunpack.c.l.b16 %v91
    %v234 = vunpack.c.h.b16 %v91
    %v235 = vunpack.c.l.b16 %v92
    %v236 = vunpack.c.h.b16 %v92
    %v237 = vunpack.c.l.b16 %v93
    %v238 = vunpack.c.h.b16 %v93
    %v239 = vunpack.c.l.b16 %v94
    %v240 = vunpack.c.h.b16 %v94
    %v241 = vunpack.c.l.b16 %v95
    %v242 = vunpack.c.h.b16 %v95
    %v243 = vpack.c.b16 %v213, %v211
    %v244 = vpack.c.b16 %v214, %v212
    %v245 = vpack.c.b16 %v217, %v215
    %v246 = vpack.c.b16 %v218, %v216
    %v247 = vpack.c.b16 %v221, %v219
    %v248 = vpack.c.b16 %v222, %v220
    %v249 = vpack.c.b16 %v225, %v223
    %v250 = vpack.c.b16 %v226, %v224
    %v251 = vpack.c.b16 %v229, %v227
    %v252 = vpack.c.b16 %v230, %v228
    %v253 = vpack.c.b16 %v233, %v231
    %v254 = vpack.c.b16 %v234, %v232
    %v255 = vpack.c.b16 %v237, %v235
    %v256 = vpack.c.b16 %v238, %v236
    %v257 = vpack.c.b16 %v241, %v239
    %v258 = vpack.c.b16 %v242, %v240
    %275 = vmatprep.subr.bf16.mxu0 %v258
    %276 = vmatpush1.bf16.msra.mxu0 %v257
    %277 = vmatprep.subr.bf16.mxu0 %v256
    %278 = vmatpush1.bf16.msra.mxu0 %v255
    %279 = vmatprep.subr.bf16.mxu0 %v254
    %280 = vmatpush1.bf16.msra.mxu0 %v253
    %281 = vmatprep.subr.bf16.mxu0 %v252
    %282 = vmatpush1.bf16.msra.mxu0 %v251
    %283 = vmatprep.subr.bf16.mxu0 %v250
    %284 = vmatpush1.bf16.msra.mxu0 %v249
    %285 = vmatprep.subr.bf16.mxu0 %v248
    %286 = vmatpush1.bf16.msra.mxu0 %v247
    %287 = vmatprep.subr.bf16.mxu0 %v246
    %288 = vmatpush1.bf16.msra.mxu0 %v245
    %289 = vmatprep.subr.bf16.mxu0 %v244
    %290 = vmatpush1.bf16.msra.mxu0 %v243
    %291 = vmatprep.subr.bf16.mxu0 0
    %292 = vmatpush2.bf16.msra.mxu0 0
    %293 = vmatprep.subr.bf16.mxu0 0
    %294 = vmatpush2.bf16.msra.mxu0 0
    %295 = vmatprep.subr.bf16.mxu0 0
    %296 = vmatpush2.bf16.msra.mxu0 0
    %297 = vmatprep.subr.bf16.mxu0 0
    %298 = vmatpush2.bf16.msra.mxu0 0
    %299 = vmatprep.subr.bf16.mxu0 0
    %300 = vmatpush2.bf16.msra.mxu0 0
    %301 = vmatprep.subr.bf16.mxu0 0
    %302 = vmatpush2.bf16.msra.mxu0 0
    %303 = vmatprep.subr.bf16.mxu0 0
    %304 = vmatpush2.bf16.msra.mxu0 0
    %305 = vmatprep.subr.bf16.mxu0 0
    %306 = vmatpush2.bf16.msra.mxu0 0
    %307 = vmatprep.mubr.bf16.mxu0 0
    %308 = vmatmul.mubr.bf16.gmra.mxu0 %v79
    %v309 = vpop.f32.mrf.mxu0
    %v310 = vadd.f32 %v188, %v309
    %v311 = vpop.f32.mrf.mxu0
    %v312 = vadd.f32 %v192, %v311
    %v313 = vpop.f32.mrf.mxu0
    %v314 = vpop.f32.mrf.mxu0
    %315 = vdwg.mxu0
    %vm316 = vcmp.ge.f32.partialorder %v310, 0.0
    %vm317 = vcmp.ge.f32.partialorder %v312, 0.0
    %v318 = vstv %s181
    %v319 = vmul.f32 %v318, %v310
    %v320 = vmul.f32 %v318, %v312
    %v321 = vsel %vm316, %v310, %v319
    %v322 = vsel %vm317, %v312, %v320
    %v323 = vpack.c.bf16 %v321, %v321
    %v324 = vpack.c.bf16 %v322, %v322
    %v326 = vlaneseq
    %v327 = vshrl.u32 %v326, 7
    %v328 = vsub.s32 0, %v327
    %v329 = vrot.slane %v178, %v328
    %v330 = vlaneseq
    %v331 = vshrl.u32 %v330, 7
    %v332 = vsub.s32 1, %v331
    %v333 = vrot.slane %v178, %v332
    %v368 = vunpack.c.l.b16 %v96
    %v369 = vunpack.c.h.b16 %v96
    %v370 = vunpack.c.l.b16 %v97
    %v371 = vunpack.c.h.b16 %v97
    %v372 = vunpack.c.l.b16 %v98
    %v373 = vunpack.c.h.b16 %v98
    %v374 = vunpack.c.l.b16 %v99
    %v375 = vunpack.c.h.b16 %v99
    %v376 = vunpack.c.l.b16 %v100
    %v377 = vunpack.c.h.b16 %v100
    %v378 = vunpack.c.l.b16 %v101
    %v379 = vunpack.c.h.b16 %v101
    %v380 = vunpack.c.l.b16 %v102
    %v381 = vunpack.c.h.b16 %v102
    %v382 = vunpack.c.l.b16 %v103
    %v383 = vunpack.c.h.b16 %v103
    %v384 = vunpack.c.l.b16 %v104
    %v385 = vunpack.c.h.b16 %v104
    %v386 = vunpack.c.l.b16 %v105
    %v387 = vunpack.c.h.b16 %v105
    %v388 = vunpack.c.l.b16 %v106
    %v389 = vunpack.c.h.b16 %v106
    %v390 = vunpack.c.l.b16 %v107
    %v391 = vunpack.c.h.b16 %v107
    %v392 = vunpack.c.l.b16 %v108
    %v393 = vunpack.c.h.b16 %v108
    %v394 = vunpack.c.l.b16 %v109
    %v395 = vunpack.c.h.b16 %v109
    %v396 = vunpack.c.l.b16 %v110
    %v397 = vunpack.c.h.b16 %v110
    %v398 = vunpack.c.l.b16 %v111
    %v399 = vunpack.c.h.b16 %v111
    %v400 = vunpack.c.l.b16 %v112
    %v401 = vunpack.c.h.b16 %v112
    %v402 = vunpack.c.l.b16 %v113
    %v403 = vunpack.c.h.b16 %v113
    %v404 = vunpack.c.l.b16 %v114
    %v405 = vunpack.c.h.b16 %v114
    %v406 = vunpack.c.l.b16 %v115
    %v407 = vunpack.c.h.b16 %v115
    %v408 = vunpack.c.l.b16 %v116
    %v409 = vunpack.c.h.b16 %v116
    %v410 = vunpack.c.l.b16 %v117
    %v411 = vunpack.c.h.b16 %v117
    %v412 = vunpack.c.l.b16 %v118
    %v413 = vunpack.c.h.b16 %v118
    %v414 = vunpack.c.l.b16 %v119
    %v415 = vunpack.c.h.b16 %v119
    %v416 = vunpack.c.l.b16 %v120
    %v417 = vunpack.c.h.b16 %v120
    %v418 = vunpack.c.l.b16 %v121
    %v419 = vunpack.c.h.b16 %v121
    %v420 = vunpack.c.l.b16 %v122
    %v421 = vunpack.c.h.b16 %v122
    %v422 = vunpack.c.l.b16 %v123
    %v423 = vunpack.c.h.b16 %v123
    %v424 = vunpack.c.l.b16 %v124
    %v425 = vunpack.c.h.b16 %v124
    %v426 = vunpack.c.l.b16 %v125
    %v427 = vunpack.c.h.b16 %v125
    %v428 = vunpack.c.l.b16 %v126
    %v429 = vunpack.c.h.b16 %v126
    %v430 = vunpack.c.l.b16 %v127
    %v431 = vunpack.c.h.b16 %v127
    %v432 = vpack.c.b16 %v370, %v368
    %v433 = vpack.c.b16 %v371, %v369
    %v434 = vpack.c.b16 %v374, %v372
    %v435 = vpack.c.b16 %v375, %v373
    %v436 = vpack.c.b16 %v378, %v376
    %v437 = vpack.c.b16 %v379, %v377
    %v438 = vpack.c.b16 %v382, %v380
    %v439 = vpack.c.b16 %v383, %v381
    %v440 = vpack.c.b16 %v386, %v384
    %v441 = vpack.c.b16 %v387, %v385
    %v442 = vpack.c.b16 %v390, %v388
    %v443 = vpack.c.b16 %v391, %v389
    %v444 = vpack.c.b16 %v394, %v392
    %v445 = vpack.c.b16 %v395, %v393
    %v446 = vpack.c.b16 %v398, %v396
    %v447 = vpack.c.b16 %v399, %v397
    %v448 = vpack.c.b16 %v402, %v400
    %v449 = vpack.c.b16 %v403, %v401
    %v450 = vpack.c.b16 %v406, %v404
    %v451 = vpack.c.b16 %v407, %v405
    %v452 = vpack.c.b16 %v410, %v408
    %v453 = vpack.c.b16 %v411, %v409
    %v454 = vpack.c.b16 %v414, %v412
    %v455 = vpack.c.b16 %v415, %v413
    %v456 = vpack.c.b16 %v418, %v416
    %v457 = vpack.c.b16 %v419, %v417
    %v458 = vpack.c.b16 %v422, %v420
    %v459 = vpack.c.b16 %v423, %v421
    %v460 = vpack.c.b16 %v426, %v424
    %v461 = vpack.c.b16 %v427, %v425
    %v462 = vpack.c.b16 %v430, %v428
    %v463 = vpack.c.b16 %v431, %v429
    %496 = vmatprep.subr.bf16.mxu0 %v447
    %497 = vmatpush1.bf16.msra.mxu0 %v446
    %498 = vmatprep.subr.bf16.mxu0 %v445
    %499 = vmatpush1.bf16.msra.mxu0 %v444
    %500 = vmatprep.subr.bf16.mxu0 %v443
    %501 = vmatpush1.bf16.msra.mxu0 %v442
    %502 = vmatprep.subr.bf16.mxu0 %v441
    %503 = vmatpush1.bf16.msra.mxu0 %v440
    %504 = vmatprep.subr.bf16.mxu0 %v439
    %505 = vmatpush1.bf16.msra.mxu0 %v438
    %506 = vmatprep.subr.bf16.mxu0 %v437
    %507 = vmatpush1.bf16.msra.mxu0 %v436
    %508 = vmatprep.subr.bf16.mxu0 %v435
    %509 = vmatpush1.bf16.msra.mxu0 %v434
    %510 = vmatprep.subr.bf16.mxu0 %v433
    %511 = vmatpush1.bf16.msra.mxu0 %v432
    %512 = vmatprep.subr.bf16.mxu0 %v463
    %513 = vmatpush2.bf16.msra.mxu0 %v462
    %514 = vmatprep.subr.bf16.mxu0 %v461
    %515 = vmatpush2.bf16.msra.mxu0 %v460
    %516 = vmatprep.subr.bf16.mxu0 %v459
    %517 = vmatpush2.bf16.msra.mxu0 %v458
    %518 = vmatprep.subr.bf16.mxu0 %v457
    %519 = vmatpush2.bf16.msra.mxu0 %v456
    %520 = vmatprep.subr.bf16.mxu0 %v455
    %521 = vmatpush2.bf16.msra.mxu0 %v454
    %522 = vmatprep.subr.bf16.mxu0 %v453
    %523 = vmatpush2.bf16.msra.mxu0 %v452
    %524 = vmatprep.subr.bf16.mxu0 %v451
    %525 = vmatpush2.bf16.msra.mxu0 %v450
    %526 = vmatprep.subr.bf16.mxu0 %v449
    %527 = vmatpush2.bf16.msra.mxu0 %v448
    %528 = vmatprep.mubr.bf16.mxu0 %v324
    %529 = vmatmul.mubr.bf16.gmra.mxu0 %v323
    %v530 = vpop.f32.mrf.mxu0
    %v531 = vadd.f32 %v329, %v530
    %v532 = vpop.f32.mrf.mxu0
    %v533 = vadd.f32 %v333, %v532
    %v534 = vpop.f32.mrf.mxu0
    %v535 = vpop.f32.mrf.mxu0
    %536 = vdwg.mxu0
    %vm537 = vcmp.ge.f32.partialorder %v531, 0.0
    %vm538 = vcmp.ge.f32.partialorder %v533, 0.0
    %v539 = vstv %s182
    %v540 = vmul.f32 %v539, %v531
    %v541 = vmul.f32 %v539, %v533
    %v542 = vsel %vm537, %v531, %v540
    %v543 = vsel %vm538, %v533, %v541
    %v544 = vpack.c.bf16 %v542, %v542
    %v545 = vpack.c.bf16 %v543, %v543
    %v578 = vunpack.c.l.b16 %v128
    %v579 = vunpack.c.l.b16 %v129
    %v580 = vunpack.c.l.b16 %v130
    %v581 = vunpack.c.l.b16 %v131
    %v582 = vunpack.c.l.b16 %v132
    %v583 = vunpack.c.l.b16 %v133
    %v584 = vunpack.c.l.b16 %v134
    %v585 = vunpack.c.l.b16 %v135
    %v586 = vunpack.c.l.b16 %v136
    %v587 = vunpack.c.l.b16 %v137
    %v588 = vunpack.c.l.b16 %v138
    %v589 = vunpack.c.l.b16 %v139
    %v590 = vunpack.c.l.b16 %v140
    %v591 = vunpack.c.l.b16 %v141
    %v592 = vunpack.c.l.b16 %v142
    %v593 = vunpack.c.l.b16 %v143
    %v594 = vunpack.c.l.b16 %v144
    %v595 = vunpack.c.l.b16 %v145
    %v596 = vunpack.c.l.b16 %v146
    %v597 = vunpack.c.l.b16 %v147
    %v598 = vunpack.c.l.b16 %v148
    %v599 = vunpack.c.l.b16 %v149
    %v600 = vunpack.c.l.b16 %v150
    %v601 = vunpack.c.l.b16 %v151
    %v602 = vunpack.c.l.b16 %v152
    %v603 = vunpack.c.l.b16 %v153
    %v604 = vunpack.c.l.b16 %v154
    %v605 = vunpack.c.l.b16 %v155
    %v606 = vunpack.c.l.b16 %v156
    %v607 = vunpack.c.l.b16 %v157
    %v608 = vunpack.c.l.b16 %v158
    %v609 = vunpack.c.l.b16 %v159
    %v610 = vpack.c.b16 %v579, %v578
    %v611 = vpack.c.b16 %v581, %v580
    %v612 = vpack.c.b16 %v583, %v582
    %v613 = vpack.c.b16 %v585, %v584
    %v614 = vpack.c.b16 %v587, %v586
    %v615 = vpack.c.b16 %v589, %v588
    %v616 = vpack.c.b16 %v591, %v590
    %v617 = vpack.c.b16 %v593, %v592
    %v618 = vpack.c.b16 %v595, %v594
    %v619 = vpack.c.b16 %v597, %v596
    %v620 = vpack.c.b16 %v599, %v598
    %v621 = vpack.c.b16 %v601, %v600
    %v622 = vpack.c.b16 %v603, %v602
    %v623 = vpack.c.b16 %v605, %v604
    %v624 = vpack.c.b16 %v607, %v606
    %v625 = vpack.c.b16 %v609, %v608
    %642 = vmatprep.subr.bf16.mxu0 0
    %643 = vmatpush1.bf16.msra.mxu0 %v617
    %644 = vmatprep.subr.bf16.mxu0 0
    %645 = vmatpush1.bf16.msra.mxu0 %v616
    %646 = vmatprep.subr.bf16.mxu0 0
    %647 = vmatpush1.bf16.msra.mxu0 %v615
    %648 = vmatprep.subr.bf16.mxu0 0
    %649 = vmatpush1.bf16.msra.mxu0 %v614
    %650 = vmatprep.subr.bf16.mxu0 0
    %651 = vmatpush1.bf16.msra.mxu0 %v613
    %652 = vmatprep.subr.bf16.mxu0 0
    %653 = vmatpush1.bf16.msra.mxu0 %v612
    %654 = vmatprep.subr.bf16.mxu0 0
    %655 = vmatpush1.bf16.msra.mxu0 %v611
    %656 = vmatprep.subr.bf16.mxu0 0
    %657 = vmatpush1.bf16.msra.mxu0 %v610
    %658 = vmatprep.subr.bf16.mxu0 0
    %659 = vmatpush2.bf16.msra.mxu0 %v625
    %660 = vmatprep.subr.bf16.mxu0 0
    %661 = vmatpush2.bf16.msra.mxu0 %v624
    %662 = vmatprep.subr.bf16.mxu0 0
    %663 = vmatpush2.bf16.msra.mxu0 %v623
    %664 = vmatprep.subr.bf16.mxu0 0
    %665 = vmatpush2.bf16.msra.mxu0 %v622
    %666 = vmatprep.subr.bf16.mxu0 0
    %667 = vmatpush2.bf16.msra.mxu0 %v621
    %668 = vmatprep.subr.bf16.mxu0 0
    %669 = vmatpush2.bf16.msra.mxu0 %v620
    %670 = vmatprep.subr.bf16.mxu0 0
    %671 = vmatpush2.bf16.msra.mxu0 %v619
    %672 = vmatprep.subr.bf16.mxu0 0
    %673 = vmatpush2.bf16.msra.mxu0 %v618
    %674 = vmatprep.mubr.bf16.mxu0 %v545
    %675 = vmatmul.mubr.bf16.gmra.mxu0 %v544
    %v676 = vpop.f32.mrf.mxu0
    %v677 = vadd.f32 %v179, %v676
    %v678 = vpop.f32.mrf.mxu0
    %v679 = vpop.f32.mrf.mxu0
    %v680 = vpop.f32.mrf.mxu0
    %681 = vdwg.mxu0
    %vm682 = vcmp.ge.f32.partialorder %v677, 0.0
    %v683 = vstv %s183
    %v684 = vmul.f32 %v683, %v677
    %v685 = vsel %vm682, %v677, %v684
    %v686 = vpack.c.bf16 %v685, %v685
    %v703 = vunpack.c.l.b16 %v160
    %v704 = vunpack.c.l.b16 %v161
    %v705 = vunpack.c.l.b16 %v162
    %v706 = vunpack.c.l.b16 %v163
    %v707 = vunpack.c.l.b16 %v164
    %v708 = vunpack.c.l.b16 %v165
    %v709 = vunpack.c.l.b16 %v166
    %v710 = vunpack.c.l.b16 %v167
    %v711 = vunpack.c.l.b16 %v168
    %v712 = vunpack.c.l.b16 %v169
    %v713 = vunpack.c.l.b16 %v170
    %v714 = vunpack.c.l.b16 %v171
    %v715 = vunpack.c.l.b16 %v172
    %v716 = vunpack.c.l.b16 %v173
    %v717 = vunpack.c.l.b16 %v174
    %v718 = vunpack.c.l.b16 %v175
    %v719 = vpack.c.b16 %v704, %v703
    %v720 = vpack.c.b16 %v706, %v705
    %v721 = vpack.c.b16 %v708, %v707
    %v722 = vpack.c.b16 %v710, %v709
    %v723 = vpack.c.b16 %v712, %v711
    %v724 = vpack.c.b16 %v714, %v713
    %v725 = vpack.c.b16 %v716, %v715
    %v726 = vpack.c.b16 %v718, %v717
    %735 = vmatprep.subr.bf16.mxu0 0
    %736 = vmatpush1.bf16.msra.mxu0 %v726
    %737 = vmatprep.subr.bf16.mxu0 0
    %738 = vmatpush1.bf16.msra.mxu0 %v725
    %739 = vmatprep.subr.bf16.mxu0 0
    %740 = vmatpush1.bf16.msra.mxu0 %v724
    %741 = vmatprep.subr.bf16.mxu0 0
    %742 = vmatpush1.bf16.msra.mxu0 %v723
    %743 = vmatprep.subr.bf16.mxu0 0
    %744 = vmatpush1.bf16.msra.mxu0 %v722
    %745 = vmatprep.subr.bf16.mxu0 0
    %746 = vmatpush1.bf16.msra.mxu0 %v721
    %747 = vmatprep.subr.bf16.mxu0 0
    %748 = vmatpush1.bf16.msra.mxu0 %v720
    %749 = vmatprep.subr.bf16.mxu0 0
    %750 = vmatpush1.bf16.msra.mxu0 %v719
    %751 = vmatprep.subr.bf16.mxu0 0
    %752 = vmatpush2.bf16.msra.mxu0 0
    %753 = vmatprep.subr.bf16.mxu0 0
    %754 = vmatpush2.bf16.msra.mxu0 0
    %755 = vmatprep.subr.bf16.mxu0 0
    %756 = vmatpush2.bf16.msra.mxu0 0
    %757 = vmatprep.subr.bf16.mxu0 0
    %758 = vmatpush2.bf16.msra.mxu0 0
    %759 = vmatprep.subr.bf16.mxu0 0
    %760 = vmatpush2.bf16.msra.mxu0 0
    %761 = vmatprep.subr.bf16.mxu0 0
    %762 = vmatpush2.bf16.msra.mxu0 0
    %763 = vmatprep.subr.bf16.mxu0 0
    %764 = vmatpush2.bf16.msra.mxu0 0
    %765 = vmatprep.subr.bf16.mxu0 0
    %766 = vmatpush2.bf16.msra.mxu0 0
    %767 = vmatprep.mubr.bf16.mxu0 0
    %768 = vmatmul.mubr.bf16.gmra.mxu0 %v686
    %v769 = vpop.f32.mrf.mxu0
    %v770 = vadd.f32 %v180, %v769
    %v771 = vpop.f32.mrf.mxu0
    %v772 = vpop.f32.mrf.mxu0
    %v773 = vpop.f32.mrf.mxu0
    %774 = vdwg.mxu0
    %775 = vst [vmem:[#allocation12] sm:$0xff] %v770
    // Predicated region
    $region34: #{_fc_pallas.1} parent=1 // pred_check
      _
    $region35: #{_fc_pallas.1} parent=1 // pred_check_branch
      %777 = sbr.rel (0) target = $region37
    $region36: #{_fc_pallas.1} parent=1 // pred_region
      %s779 = ssub.s32 128, 128
      %780 = vsyncadd [#allocation6], %s779
      %s782 = sshll.u32 [#allocation12], 4
      %s783 = int_to_ptr.vmem [resolvable:$true] %s782
      %785 = dma.vmem_to_hbm [thread:$0]  %s783, 128, %s5, [#allocation6]
    $region37: #{_fc_pallas.1} parent=1 // pred_fallthru
      _
    // Predicated region
    $region38: #{_fc_pallas.1} parent=1 // pred_check
      _
    $region39: #{_fc_pallas.1} parent=1 // pred_check_branch
      %787 = sbr.rel (0) target = $region41
    $region40: #{_fc_pallas.1} parent=1 // pred_region
      %788 = dma.done [#allocation6], 128
    $region41: #{_fc_pallas.1} parent=1 // pred_fallthru
      _
    %789 = vsyncpa [#allocation5], 1
    %790 = vsyncpa [#allocation8], 1
    %791 = vsyncpa [#allocation11], 1
    %792 = vsyncpa [#allocation6], 1

</llo_original>
